<compile_context>
chip_gen: v7x
topology: tpu7x:2x2x1
jax: 0.10.0
libtpu: 0.0.40
codegen_flags: <defaults>
</compile_context>

<pallas_src>
import jax
import jax.numpy as jnp
from jax.experimental import pallas as pl
from jax.experimental.pallas import tpu as pltpu

IN_FEATURES = 256
HIDDEN = 256
OUT_FEATURES = 5
OUT_PAD = 128  # lane-dense padded output width (multiple of 128)


def regressor_kernel(x_ref, w1_ref, b1_ref, w2_ref, b2_ref, o_ref):
    # x_ref:  (B, 256)   bf16
    # w1_ref: (256, 256) bf16          b1_ref: (1, 256) f32
    # w2_ref: (256, 128) bf16 (cols 5..127 are zero)
    # b2_ref: (1, 128)   f32  (cols 5..127 are zero)
    # o_ref:  (B, 128)   f32  (lane-dense store; wrapper slices [:, :5])
    h = jnp.dot(x_ref[...], w1_ref[...], preferred_element_type=jnp.float32)
    h = jnp.maximum(h + b1_ref[...], 0.0)                      # bias + ReLU on the VPU
    y = jnp.dot(h.astype(jnp.bfloat16), w2_ref[...],
                preferred_element_type=jnp.float32)
    o_ref[...] = y + b2_ref[...]


def prepare_params(w1, b1, w2, b2):
    """One-time weight prep (cast to bf16, pad fc2 to 128 cols). Hoisted out of
    the per-call path so the per-call cost is just the DMA + two MXU passes."""
    w1p = w1.astype(jnp.bfloat16)                               # (256, 256) bf16
    b1p = b1.reshape(1, HIDDEN).astype(jnp.float32)             # (1, 256)   f32
    w2p = jnp.zeros((IN_FEATURES, OUT_PAD), jnp.bfloat16)
    w2p = w2p.at[:, :OUT_FEATURES].set(w2.astype(jnp.bfloat16)) # (256, 128) bf16
    b2p = jnp.zeros((1, OUT_PAD), jnp.float32)
    b2p = b2p.at[:, :OUT_FEATURES].set(b2.reshape(-1).astype(jnp.float32))
    return w1p, b1p, w2p, b2p


@jax.jit
def regressor_forward(x_nchw, w1p, b1p, w2p, b2p):
    """x_nchw: (B, C, H, W) with C*H*W == 256. Returns (B, 5) float32."""
    B = x_nchw.shape[0]
    x_flat = x_nchw.reshape(B, -1).astype(jnp.bfloat16)         # torch.flatten(x, 1)
    assert x_flat.shape[1] == IN_FEATURES, "Regressor expects 256 input features"

    vmem = pl.BlockSpec(memory_space=pltpu.MemorySpace.VMEM)
    out_padded = pl.pallas_call(
        regressor_kernel,
        out_shape=jax.ShapeDtypeStruct((B, OUT_PAD), jnp.float32),
        in_specs=[vmem, vmem, vmem, vmem, vmem],
        out_specs=vmem,
    )(x_flat, w1p, b1p, w2p, b2p)
    return out_padded[:, :OUT_FEATURES]


def init_params(key):
    # Deterministic synthetic init mimicking nn.Linear's U(-1/sqrt(fan_in), 1/sqrt(fan_in)).
    # Weights are stored (in_features, out_features) so the kernel computes x @ W + b.
    k1, k2, k3, k4 = jax.random.split(key, 4)
    bound = 1.0 / (256.0 ** 0.5)
    w1 = jax.random.uniform(k1, (IN_FEATURES, HIDDEN), jnp.float32, -bound, bound)
    b1 = jax.random.uniform(k2, (HIDDEN,), jnp.float32, -bound, bound)
    w2 = jax.random.uniform(k3, (IN_FEATURES, OUT_FEATURES), jnp.float32, -bound, bound)
    b2 = jax.random.uniform(k4, (OUT_FEATURES,), jnp.float32, -bound, bound)
    return w1, b1, w2, b2


if __name__ == "__main__":
    key = jax.random.PRNGKey(0)
    kx, kp = jax.random.split(key)

    # (B, C, H, W) = (2, 4, 8, 8) -> flattens to (2, 256)
    x = jax.random.normal(kx, (2, 4, 8, 8), jnp.float32)
    w1, b1, w2, b2 = init_params(kp)

    params = prepare_params(w1, b1, w2, b2)
    out = regressor_forward(x, *params)
    out = jax.block_until_ready(out)
    assert out.shape == (2, OUT_FEATURES)

    # Reference #1: identical numerics (bf16 matmul operands, f32 accumulation) in plain JAX.
    x_flat = x.reshape(2, -1)
    h_ref = jnp.maximum(
        jnp.dot(x_flat.astype(jnp.bfloat16), w1.astype(jnp.bfloat16),
                preferred_element_type=jnp.float32) + b1[None, :], 0.0)
    ref_bf16 = jnp.dot(h_ref.astype(jnp.bfloat16), w2.astype(jnp.bfloat16),
                       preferred_element_type=jnp.float32) + b2[None, :]
    assert jnp.allclose(out, ref_bf16, atol=1e-3, rtol=1e-3), "mismatch vs bf16 reference"

    # Reference #2: pure-f32 math of the original module (loose tol covers bf16 rounding).
    ref_f32 = jnp.maximum(x_flat @ w1 + b1[None, :], 0.0) @ w2 + b2[None, :]
    assert jnp.allclose(out, ref_f32, atol=5e-2, rtol=5e-2), "mismatch vs f32 reference"

    print("KERNEL_OK")
</pallas_src>

<mosaic_0001>
module attributes {stable_mosaic.version = 11 : i64} {
  func.func @regressor_kernel(%arg0: memref<2x256xbf16, #tpu.memory_space<vmem>>, %arg1: memref<256x256xbf16, #tpu.memory_space<vmem>>, %arg2: memref<1x256xf32, #tpu.memory_space<vmem>>, %arg3: memref<256x128xbf16, #tpu.memory_space<vmem>>, %arg4: memref<1x128xf32, #tpu.memory_space<vmem>>, %arg5: memref<2x128xf32, #tpu.memory_space<vmem>>) attributes {dimension_semantics = [], scalar_prefetch = 0 : i64, scratch_operands = 0 : i64, tpu.core_type = #tpu.core_type<tc>} {
    %c0 = arith.constant 0 : index
    %c0_0 = arith.constant 0 : index
    %0 = vector.load %arg0[%c0, %c0_0] : memref<2x256xbf16, #tpu.memory_space<vmem>>, vector<2x256xbf16>
    %c0_1 = arith.constant 0 : index
    %c0_2 = arith.constant 0 : index
    %1 = vector.load %arg1[%c0_1, %c0_2] : memref<256x256xbf16, #tpu.memory_space<vmem>>, vector<256x256xbf16>
    %cst = arith.constant dense<0.000000e+00> : vector<2x256xf32>
    %2 = tpu.matmul %0, %1, %cst {dimension_numbers = #tpu.dot_dimension_numbers<[1], [0], [0], [1], [0, 0, 1, 1], [], []>} : vector<2x256xbf16>, vector<256x256xbf16>, vector<2x256xf32> -> vector<2x256xf32>
    %c0_3 = arith.constant 0 : index
    %c0_4 = arith.constant 0 : index
    %3 = vector.load %arg2[%c0_3, %c0_4] : memref<1x256xf32, #tpu.memory_space<vmem>>, vector<1x256xf32>
    %4 = vector.broadcast %3 : vector<1x256xf32> to vector<2x256xf32>
    %5 = arith.addf %2, %4 : vector<2x256xf32>
    %cst_5 = arith.constant 0.000000e+00 : f32
    %6 = vector.broadcast %cst_5 : f32 to vector<2x256xf32>
    %7 = arith.maximumf %5, %6 : vector<2x256xf32>
    %8 = arith.truncf %7 : vector<2x256xf32> to vector<2x256xbf16>
    %c0_6 = arith.constant 0 : index
    %c0_7 = arith.constant 0 : index
    %9 = vector.load %arg3[%c0_6, %c0_7] : memref<256x128xbf16, #tpu.memory_space<vmem>>, vector<256x128xbf16>
    %cst_8 = arith.constant dense<0.000000e+00> : vector<2x128xf32>
    %10 = tpu.matmul %8, %9, %cst_8 {dimension_numbers = #tpu.dot_dimension_numbers<[1], [0], [0], [1], [0, 0, 1, 1], [], []>} : vector<2x256xbf16>, vector<256x128xbf16>, vector<2x128xf32> -> vector<2x128xf32>
    %c0_9 = arith.constant 0 : index
    %c0_10 = arith.constant 0 : index
    %11 = vector.load %arg4[%c0_9, %c0_10] : memref<1x128xf32, #tpu.memory_space<vmem>>, vector<1x128xf32>
    %12 = vector.broadcast %11 : vector<1x128xf32> to vector<2x128xf32>
    %13 = arith.addf %10, %12 : vector<2x128xf32>
    %c0_11 = arith.constant 0 : index
    %c0_12 = arith.constant 0 : index
    %14 = vector.load %arg5[%c0_11, %c0_12] : memref<2x128xf32, #tpu.memory_space<vmem>>, vector<2x128xf32>
    tpu.vector_store %arg5[%c0_11, %c0_12], %13 {strides = array<i32>} : memref<2x128xf32, #tpu.memory_space<vmem>>, vector<2x128xf32>,
    return
  }
}

</mosaic_0001>

<llo_original>
// kernel: regressor_forward.1
$region0: #{regressor_forward.1}
  #allocation0 [shape = 'u32[]', space=smem, size = 0x4, offset = 0x4, fixed_abs, tag = 'smem constant byte address 0x4 - core index']
  #allocation1 [shape = 'u32[144,128]{1,0:T(1,128)}', space=vmem, size = 0x12000, scoped, tag = 'internal scratch']
  %s0 = inlined_call_operand.vmem [shape: bf16[2,256], index: 0, kind: input, shape index: {}]
  %s1 = inlined_call_operand.hbm [shape: bf16[256,256], index: 1, kind: input, shape index: {}]
  %s2 = inlined_call_operand.vmem [shape: f32[1,256], index: 2, kind: input, shape index: {}]
  %s3 = inlined_call_operand.vmem [shape: bf16[256,128], index: 3, kind: input, shape index: {}]
  %s4 = inlined_call_operand.vmem [shape: f32[1,128], index: 4, kind: input, shape index: {}]
  %s5 = inlined_call_operand.hbm [shape: f32[2,128], index: 5, kind: output, shape index: {}]
  %s6 = sld [smem:[#allocation0]]
  $region34: #{regressor_forward.1} parent=0
    _
  %s8 = ssub.s32 1, %s6
  %s9 = scalar_select 0, %s8, %s6
  $region1: #{regressor_forward.1} parent=0
    #allocation2 [shape = 'u8[131072]{0}', space=vmem, size = 0x20000, scoped, tag = 'input window, operand 1, single buffered']
    #allocation3 [shape = 's32[1]{0}', space=sflag, size = 0x4, scoped, tag = 'scoped memory for regressor_forward.1']
    #allocation4 [shape = 's32[1]{0}', space=sflag, size = 0x4, scoped, tag = 'scoped memory for regressor_forward.1']
    #allocation5 [shape = 'u8[1024]{0}', space=vmem, size = 0x400, scoped, tag = 'output window, operand 0, single buffered']
    %10 = vsyncpa [#allocation3], 0
    %11 = vsyncpa [#allocation4], 0
    // Predicated region
    $region2: #{regressor_forward.1} parent=1 // pred_check
      _
    $region3: #{regressor_forward.1} parent=1 // pred_check_branch
      %13 = sbr.rel (0) target = $region5
    $region4: #{regressor_forward.1} parent=1 // pred_region
      _
    $region5: #{regressor_forward.1} parent=1 // pred_fallthru
      _
    // Predicated region
    $region6: #{regressor_forward.1} parent=1 // pred_check
      _
    $region7: #{regressor_forward.1} parent=1 // pred_check_branch
      %15 = sbr.rel (0) target = $region9
    $region8: #{regressor_forward.1} parent=1 // pred_region
      %s17 = ssub.s32 4096, 4096
      %18 = vsyncadd [#allocation3], %s17
      %s19 = sshll.u32 [#allocation2], 4
      %s20 = int_to_ptr.vmem [resolvable:$true] %s19
      %25 = dma.hbm_to_vmem [thread:$0]  %s1, 4096, %s20, [#allocation3], 128, 128, 8
    $region9: #{regressor_forward.1} parent=1 // pred_fallthru
      _
    // Predicated region
    $region10: #{regressor_forward.1} parent=1 // pred_check
      _
    $region11: #{regressor_forward.1} parent=1 // pred_check_branch
      %27 = sbr.rel (0) target = $region13
    $region12: #{regressor_forward.1} parent=1 // pred_region
      _
    $region13: #{regressor_forward.1} parent=1 // pred_fallthru
      _
    // Predicated region
    $region14: #{regressor_forward.1} parent=1 // pred_check
      _
    $region15: #{regressor_forward.1} parent=1 // pred_check_branch
      %29 = sbr.rel (0) target = $region17
    $region16: #{regressor_forward.1} parent=1 // pred_region
      _
    $region17: #{regressor_forward.1} parent=1 // pred_fallthru
      _
    // Predicated region
    $region18: #{regressor_forward.1} parent=1 // pred_check
      _
    $region19: #{regressor_forward.1} parent=1 // pred_check_branch
      %31 = sbr.rel (0) target = $region21
    $region20: #{regressor_forward.1} parent=1 // pred_region
      _
    $region21: #{regressor_forward.1} parent=1 // pred_fallthru
      _
    // Predicated region
    $region22: #{regressor_forward.1} parent=1 // pred_check
      _
    $region23: #{regressor_forward.1} parent=1 // pred_check_branch
      %33 = sbr.rel (0) target = $region25
    $region24: #{regressor_forward.1} parent=1 // pred_region
      %34 = dma.done [#allocation3], 4096
    $region25: #{regressor_forward.1} parent=1 // pred_fallthru
      _
    %v36 = vld [vmem:[%s0] sm:$0x3]
    %v37 = vld [vmem:[#allocation2] sm:$0xff]
    %v38 = vld [vmem:[#allocation2 + $0x8] sm:$0xff]
    %v39 = vld [vmem:[#allocation2 + $0x10] sm:$0xff]
    %v40 = vld [vmem:[#allocation2 + $0x18] sm:$0xff]
    %v41 = vld [vmem:[#allocation2 + $0x20] sm:$0xff]
    %v42 = vld [vmem:[#allocation2 + $0x28] sm:$0xff]
    %v43 = vld [vmem:[#allocation2 + $0x30] sm:$0xff]
    %v44 = vld [vmem:[#allocation2 + $0x38] sm:$0xff]
    %v45 = vld [vmem:[#allocation2 + $0x40] sm:$0xff]
    %v46 = vld [vmem:[#allocation2 + $0x48] sm:$0xff]
    %v47 = vld [vmem:[#allocation2 + $0x50] sm:$0xff]
    %v48 = vld [vmem:[#allocation2 + $0x58] sm:$0xff]
    %v49 = vld [vmem:[#allocation2 + $0x60] sm:$0xff]
    %v50 = vld [vmem:[#allocation2 + $0x68] sm:$0xff]
    %v51 = vld [vmem:[#allocation2 + $0x70] sm:$0xff]
    %v52 = vld [vmem:[#allocation2 + $0x78] sm:$0xff]
    %v53 = vld [vmem:[#allocation2 + $0x80] sm:$0xff]
    %v54 = vld [vmem:[#allocation2 + $0x88] sm:$0xff]
    %v55 = vld [vmem:[#allocation2 + $0x90] sm:$0xff]
    %v56 = vld [vmem:[#allocation2 + $0x98] sm:$0xff]
    %v57 = vld [vmem:[#allocation2 + $0xa0] sm:$0xff]
    %v58 = vld [vmem:[#allocation2 + $0xa8] sm:$0xff]
    %v59 = vld [vmem:[#allocation2 + $0xb0] sm:$0xff]
    %v60 = vld [vmem:[#allocation2 + $0xb8] sm:$0xff]
    %v61 = vld [vmem:[#allocation2 + $0xc0] sm:$0xff]
    %v62 = vld [vmem:[#allocation2 + $0xc8] sm:$0xff]
    %v63 = vld [vmem:[#allocation2 + $0xd0] sm:$0xff]
    %v64 = vld [vmem:[#allocation2 + $0xd8] sm:$0xff]
    %v65 = vld [vmem:[#allocation2 + $0xe0] sm:$0xff]
    %v66 = vld [vmem:[#allocation2 + $0xe8] sm:$0xff]
    %v67 = vld [vmem:[#allocation2 + $0xf0] sm:$0xff]
    %v68 = vld [vmem:[#allocation2 + $0xf8] sm:$0xff]
    %v69 = vld [vmem:[%s2] sm:$0x3]
    %v71 = vlaneseq
    %v72 = vshrl.u32 %v71, 7
    %v73 = vsub.s32 0, %v72
    %v74 = vrot.slane %v69, %v73
    %v75 = vlaneseq
    %v76 = vshrl.u32 %v75, 7
    %v77 = vsub.s32 1, %v76
    %v78 = vrot.slane %v69, %v77
    %v83 = vunpack.c.l.s4 1966171168
    %v84 = vunpack.c.0.s8 %v83
    %v85 = vlaneseq
    %v86 = vshrl.u32 %v85, 7
    %v87 = vsub.s32 %v84, %v86
    %v88 = vrot.slane %v36, %v87
    %v89 = vcombine.high %v88, %v88
    %v91 = vunpack.c.l.s4 1966171168
    %v92 = vunpack.c.0.s8 %v91
    %v93 = vlaneseq
    %v94 = vshrl.u32 %v93, 7
    %v95 = vsub.s32 %v92, %v94
    %v96 = vrot.slane %v88, %v95
    %v98 = vunpack.c.l.s4 1966171168
    %v99 = vunpack.c.0.s8 %v98
    %v100 = vlaneseq
    %v101 = vshrl.u32 %v100, 7
    %v102 = vsub.s32 %v99, %v101
    %v103 = vrot.slane %v89, %v102
    %v138 = vunpack.c.l.b16 %v37
    %v139 = vunpack.c.h.b16 %v37
    %v140 = vunpack.c.l.b16 %v38
    %v141 = vunpack.c.h.b16 %v38
    %v142 = vunpack.c.l.b16 %v39
    %v143 = vunpack.c.h.b16 %v39
    %v144 = vunpack.c.l.b16 %v40
    %v145 = vunpack.c.h.b16 %v40
    %v146 = vunpack.c.l.b16 %v41
    %v147 = vunpack.c.h.b16 %v41
    %v148 = vunpack.c.l.b16 %v42
    %v149 = vunpack.c.h.b16 %v42
    %v150 = vunpack.c.l.b16 %v43
    %v151 = vunpack.c.h.b16 %v43
    %v152 = vunpack.c.l.b16 %v44
    %v153 = vunpack.c.h.b16 %v44
    %v154 = vunpack.c.l.b16 %v45
    %v155 = vunpack.c.h.b16 %v45
    %v156 = vunpack.c.l.b16 %v46
    %v157 = vunpack.c.h.b16 %v46
    %v158 = vunpack.c.l.b16 %v47
    %v159 = vunpack.c.h.b16 %v47
    %v160 = vunpack.c.l.b16 %v48
    %v161 = vunpack.c.h.b16 %v48
    %v162 = vunpack.c.l.b16 %v49
    %v163 = vunpack.c.h.b16 %v49
    %v164 = vunpack.c.l.b16 %v50
    %v165 = vunpack.c.h.b16 %v50
    %v166 = vunpack.c.l.b16 %v51
    %v167 = vunpack.c.h.b16 %v51
    %v168 = vunpack.c.l.b16 %v52
    %v169 = vunpack.c.h.b16 %v52
    %v170 = vunpack.c.l.b16 %v53
    %v171 = vunpack.c.h.b16 %v53
    %v172 = vunpack.c.l.b16 %v54
    %v173 = vunpack.c.h.b16 %v54
    %v174 = vunpack.c.l.b16 %v55
    %v175 = vunpack.c.h.b16 %v55
    %v176 = vunpack.c.l.b16 %v56
    %v177 = vunpack.c.h.b16 %v56
    %v178 = vunpack.c.l.b16 %v57
    %v179 = vunpack.c.h.b16 %v57
    %v180 = vunpack.c.l.b16 %v58
    %v181 = vunpack.c.h.b16 %v58
    %v182 = vunpack.c.l.b16 %v59
    %v183 = vunpack.c.h.b16 %v59
    %v184 = vunpack.c.l.b16 %v60
    %v185 = vunpack.c.h.b16 %v60
    %v186 = vunpack.c.l.b16 %v61
    %v187 = vunpack.c.h.b16 %v61
    %v188 = vunpack.c.l.b16 %v62
    %v189 = vunpack.c.h.b16 %v62
    %v190 = vunpack.c.l.b16 %v63
    %v191 = vunpack.c.h.b16 %v63
    %v192 = vunpack.c.l.b16 %v64
    %v193 = vunpack.c.h.b16 %v64
    %v194 = vunpack.c.l.b16 %v65
    %v195 = vunpack.c.h.b16 %v65
    %v196 = vunpack.c.l.b16 %v66
    %v197 = vunpack.c.h.b16 %v66
    %v198 = vunpack.c.l.b16 %v67
    %v199 = vunpack.c.h.b16 %v67
    %v200 = vunpack.c.l.b16 %v68
    %v201 = vunpack.c.h.b16 %v68
    %v202 = vpack.c.b16 %v140, %v138
    %v203 = vpack.c.b16 %v141, %v139
    %v204 = vpack.c.b16 %v144, %v142
    %v205 = vpack.c.b16 %v145, %v143
    %v206 = vpack.c.b16 %v148, %v146
    %v207 = vpack.c.b16 %v149, %v147
    %v208 = vpack.c.b16 %v152, %v150
    %v209 = vpack.c.b16 %v153, %v151
    %v210 = vpack.c.b16 %v156, %v154
    %v211 = vpack.c.b16 %v157, %v155
    %v212 = vpack.c.b16 %v160, %v158
    %v213 = vpack.c.b16 %v161, %v159
    %v214 = vpack.c.b16 %v164, %v162
    %v215 = vpack.c.b16 %v165, %v163
    %v216 = vpack.c.b16 %v168, %v166
    %v217 = vpack.c.b16 %v169, %v167
    %v218 = vpack.c.b16 %v172, %v170
    %v219 = vpack.c.b16 %v173, %v171
    %v220 = vpack.c.b16 %v176, %v174
    %v221 = vpack.c.b16 %v177, %v175
    %v222 = vpack.c.b16 %v180, %v178
    %v223 = vpack.c.b16 %v181, %v179
    %v224 = vpack.c.b16 %v184, %v182
    %v225 = vpack.c.b16 %v185, %v183
    %v226 = vpack.c.b16 %v188, %v186
    %v227 = vpack.c.b16 %v189, %v187
    %v228 = vpack.c.b16 %v192, %v190
    %v229 = vpack.c.b16 %v193, %v191
    %v230 = vpack.c.b16 %v196, %v194
    %v231 = vpack.c.b16 %v197, %v195
    %v232 = vpack.c.b16 %v200, %v198
    %v233 = vpack.c.b16 %v201, %v199
    %266 = vmatprep.subr.bf16.mxu0 %v203
    %267 = vmatpush1.bf16.msra.mxu0 %v202
    %268 = vmatprep.subr.bf16.mxu0 %v205
    %269 = vmatpush1.bf16.msra.mxu0 %v204
    %270 = vmatprep.subr.bf16.mxu0 %v207
    %271 = vmatpush1.bf16.msra.mxu0 %v206
    %272 = vmatprep.subr.bf16.mxu0 %v209
    %273 = vmatpush1.bf16.msra.mxu0 %v208
    %274 = vmatprep.subr.bf16.mxu0 %v211
    %275 = vmatpush1.bf16.msra.mxu0 %v210
    %276 = vmatprep.subr.bf16.mxu0 %v213
    %277 = vmatpush1.bf16.msra.mxu0 %v212
    %278 = vmatprep.subr.bf16.mxu0 %v215
    %279 = vmatpush1.bf16.msra.mxu0 %v214
    %280 = vmatprep.subr.bf16.mxu0 %v217
    %281 = vmatpush1.bf16.msra.mxu0 %v216
    %282 = vmatprep.subr.bf16.mxu0 %v219
    %283 = vmatpush1.bf16.msra.mxu0 %v218
    %284 = vmatprep.subr.bf16.mxu0 %v221
    %285 = vmatpush1.bf16.msra.mxu0 %v220
    %286 = vmatprep.subr.bf16.mxu0 %v223
    %287 = vmatpush1.bf16.msra.mxu0 %v222
    %288 = vmatprep.subr.bf16.mxu0 %v225
    %289 = vmatpush1.bf16.msra.mxu0 %v224
    %290 = vmatprep.subr.bf16.mxu0 %v227
    %291 = vmatpush1.bf16.msra.mxu0 %v226
    %292 = vmatprep.subr.bf16.mxu0 %v229
    %293 = vmatpush1.bf16.msra.mxu0 %v228
    %294 = vmatprep.subr.bf16.mxu0 %v231
    %295 = vmatpush1.bf16.msra.mxu0 %v230
    %296 = vmatprep.subr.bf16.mxu0 %v233
    %297 = vmatpush1.bf16.msra.mxu0 %v232
    %298 = vmatprep.mubr.bf16.mxu0 %v103
    %299 = vmatmul.mubr.bf16.gmra.mrb[0].mxu0 %v96
    %v300 = vpop.f32.mrb[0].mxu0
    %v301 = vadd.f32 %v74, %v300
    %v302 = vpop.f32.mrb[0].mxu0
    %v303 = vadd.f32 %v78, %v302
    %v304 = vpop.f32.mrb[0].mxu0
    %v305 = vpop.f32.mrb[0].mxu0
    %306 = vdwg.mxu0
    %v307 = vmax.f32 %v301, 0.0
    %v308 = vmax.f32 %v303, 0.0
    %v309 = vpack.c.bf16 %v307, %v307
    %v310 = vpack.c.bf16 %v308, %v308
    %v311 = vld [vmem:[%s3] sm:$0xf]
    %v312 = vld [vmem:[%s3 + $0x4] sm:$0xf]
    %v313 = vld [vmem:[%s3 + $0x8] sm:$0xf]
    %v314 = vld [vmem:[%s3 + $0xc] sm:$0xf]
    %v315 = vld [vmem:[%s3 + $0x10] sm:$0xf]
    %v316 = vld [vmem:[%s3 + $0x14] sm:$0xf]
    %v317 = vld [vmem:[%s3 + $0x18] sm:$0xf]
    %v318 = vld [vmem:[%s3 + $0x1c] sm:$0xf]
    %v319 = vld [vmem:[%s3 + $0x20] sm:$0xf]
    %v320 = vld [vmem:[%s3 + $0x24] sm:$0xf]
    %v321 = vld [vmem:[%s3 + $0x28] sm:$0xf]
    %v322 = vld [vmem:[%s3 + $0x2c] sm:$0xf]
    %v323 = vld [vmem:[%s3 + $0x30] sm:$0xf]
    %v324 = vld [vmem:[%s3 + $0x34] sm:$0xf]
    %v325 = vld [vmem:[%s3 + $0x38] sm:$0xf]
    %v326 = vld [vmem:[%s3 + $0x3c] sm:$0xf]
    %v327 = vld [vmem:[%s3 + $0x40] sm:$0xf]
    %v328 = vld [vmem:[%s3 + $0x44] sm:$0xf]
    %v329 = vld [vmem:[%s3 + $0x48] sm:$0xf]
    %v330 = vld [vmem:[%s3 + $0x4c] sm:$0xf]
    %v331 = vld [vmem:[%s3 + $0x50] sm:$0xf]
    %v332 = vld [vmem:[%s3 + $0x54] sm:$0xf]
    %v333 = vld [vmem:[%s3 + $0x58] sm:$0xf]
    %v334 = vld [vmem:[%s3 + $0x5c] sm:$0xf]
    %v335 = vld [vmem:[%s3 + $0x60] sm:$0xf]
    %v336 = vld [vmem:[%s3 + $0x64] sm:$0xf]
    %v337 = vld [vmem:[%s3 + $0x68] sm:$0xf]
    %v338 = vld [vmem:[%s3 + $0x6c] sm:$0xf]
    %v339 = vld [vmem:[%s3 + $0x70] sm:$0xf]
    %v340 = vld [vmem:[%s3 + $0x74] sm:$0xf]
    %v341 = vld [vmem:[%s3 + $0x78] sm:$0xf]
    %v342 = vld [vmem:[%s3 + $0x7c] sm:$0xf]
    %v343 = vld [vmem:[%s4] sm:$0x1]
    %v345 = vlaneseq
    %v346 = vshrl.u32 %v345, 7
    %v347 = vsub.s32 0, %v346
    %v348 = vrot.slane %v343, %v347
    %v382 = vunpack.c.l.b16 %v311
    %v383 = vunpack.c.l.b16 %v312
    %v384 = vunpack.c.l.b16 %v313
    %v385 = vunpack.c.l.b16 %v314
    %v386 = vunpack.c.l.b16 %v315
    %v387 = vunpack.c.l.b16 %v316
    %v388 = vunpack.c.l.b16 %v317
    %v389 = vunpack.c.l.b16 %v318
    %v390 = vunpack.c.l.b16 %v319
    %v391 = vunpack.c.l.b16 %v320
    %v392 = vunpack.c.l.b16 %v321
    %v393 = vunpack.c.l.b16 %v322
    %v394 = vunpack.c.l.b16 %v323
    %v395 = vunpack.c.l.b16 %v324
    %v396 = vunpack.c.l.b16 %v325
    %v397 = vunpack.c.l.b16 %v326
    %v398 = vunpack.c.l.b16 %v327
    %v399 = vunpack.c.l.b16 %v328
    %v400 = vunpack.c.l.b16 %v329
    %v401 = vunpack.c.l.b16 %v330
    %v402 = vunpack.c.l.b16 %v331
    %v403 = vunpack.c.l.b16 %v332
    %v404 = vunpack.c.l.b16 %v333
    %v405 = vunpack.c.l.b16 %v334
    %v406 = vunpack.c.l.b16 %v335
    %v407 = vunpack.c.l.b16 %v336
    %v408 = vunpack.c.l.b16 %v337
    %v409 = vunpack.c.l.b16 %v338
    %v410 = vunpack.c.l.b16 %v339
    %v411 = vunpack.c.l.b16 %v340
    %v412 = vunpack.c.l.b16 %v341
    %v413 = vunpack.c.l.b16 %v342
    %v414 = vpack.c.b16 %v383, %v382
    %v415 = vpack.c.b16 %v385, %v384
    %v416 = vpack.c.b16 %v387, %v386
    %v417 = vpack.c.b16 %v389, %v388
    %v418 = vpack.c.b16 %v391, %v390
    %v419 = vpack.c.b16 %v393, %v392
    %v420 = vpack.c.b16 %v395, %v394
    %v421 = vpack.c.b16 %v397, %v396
    %v422 = vpack.c.b16 %v399, %v398
    %v423 = vpack.c.b16 %v401, %v400
    %v424 = vpack.c.b16 %v403, %v402
    %v425 = vpack.c.b16 %v405, %v404
    %v426 = vpack.c.b16 %v407, %v406
    %v427 = vpack.c.b16 %v409, %v408
    %v428 = vpack.c.b16 %v411, %v410
    %v429 = vpack.c.b16 %v413, %v412
    %446 = vmatprep.subr.bf16.mxu0 0
    %447 = vmatpush1.bf16.msra.mxu0 %v414
    %448 = vmatprep.subr.bf16.mxu0 0
    %449 = vmatpush1.bf16.msra.mxu0 %v415
    %450 = vmatprep.subr.bf16.mxu0 0
    %451 = vmatpush1.bf16.msra.mxu0 %v416
    %452 = vmatprep.subr.bf16.mxu0 0
    %453 = vmatpush1.bf16.msra.mxu0 %v417
    %454 = vmatprep.subr.bf16.mxu0 0
    %455 = vmatpush1.bf16.msra.mxu0 %v418
    %456 = vmatprep.subr.bf16.mxu0 0
    %457 = vmatpush1.bf16.msra.mxu0 %v419
    %458 = vmatprep.subr.bf16.mxu0 0
    %459 = vmatpush1.bf16.msra.mxu0 %v420
    %460 = vmatprep.subr.bf16.mxu0 0
    %461 = vmatpush1.bf16.msra.mxu0 %v421
    %462 = vmatprep.subr.bf16.mxu0 0
    %463 = vmatpush1.bf16.msra.mxu0 %v422
    %464 = vmatprep.subr.bf16.mxu0 0
    %465 = vmatpush1.bf16.msra.mxu0 %v423
    %466 = vmatprep.subr.bf16.mxu0 0
    %467 = vmatpush1.bf16.msra.mxu0 %v424
    %468 = vmatprep.subr.bf16.mxu0 0
    %469 = vmatpush1.bf16.msra.mxu0 %v425
    %470 = vmatprep.subr.bf16.mxu0 0
    %471 = vmatpush1.bf16.msra.mxu0 %v426
    %472 = vmatprep.subr.bf16.mxu0 0
    %473 = vmatpush1.bf16.msra.mxu0 %v427
    %474 = vmatprep.subr.bf16.mxu0 0
    %475 = vmatpush1.bf16.msra.mxu0 %v428
    %476 = vmatprep.subr.bf16.mxu0 0
    %477 = vmatpush1.bf16.msra.mxu0 %v429
    %478 = vmatprep.mubr.bf16.mxu0 %v310
    %479 = vmatmul.mubr.bf16.gmra.mrb[0].mxu0 %v309
    %v480 = vpop.f32.mrb[0].mxu0
    %v481 = vadd.f32 %v348, %v480
    %v482 = vpop.f32.mrb[0].mxu0
    %v483 = vpop.f32.mrb[0].mxu0
    %v484 = vpop.f32.mrb[0].mxu0
    %485 = vdwg.mxu0
    %486 = vst [vmem:[#allocation5] sm:$0x3] %v481
    // Predicated region
    $region26: #{regressor_forward.1} parent=1 // pred_check
      _
    $region27: #{regressor_forward.1} parent=1 // pred_check_branch
      %488 = sbr.rel (0) target = $region29
    $region28: #{regressor_forward.1} parent=1 // pred_region
      %s490 = ssub.s32 32, 32
      %491 = vsyncadd [#allocation4], %s490
      %s493 = sshll.u32 [#allocation5], 4
      %s494 = int_to_ptr.vmem [resolvable:$true] %s493
      %496 = dma.vmem_to_hbm [thread:$0]  %s494, 32, %s5, [#allocation4]
    $region29: #{regressor_forward.1} parent=1 // pred_fallthru
      _
    // Predicated region
    $region30: #{regressor_forward.1} parent=1 // pred_check
      _
    $region31: #{regressor_forward.1} parent=1 // pred_check_branch
      %498 = sbr.rel (0) target = $region33
    $region32: #{regressor_forward.1} parent=1 // pred_region
      %499 = dma.done [#allocation4], 32
    $region33: #{regressor_forward.1} parent=1 // pred_fallthru
      _
    %500 = vsyncpa [#allocation3], 1
    %501 = vsyncpa [#allocation4], 1

</llo_original>
